<compile_context>
chip_gen: v7x
topology: tpu7x:2x2x1
jax: 0.10.0
libtpu: 0.0.40
codegen_flags: <defaults>
</compile_context>

<pallas_src>
import functools

import jax
import jax.numpy as jnp
from jax.experimental import pallas as pl
from jax.experimental.pallas import tpu as pltpu


def _round_up(x, m):
    return ((x + m - 1) // m) * m


# dot_general dimension_numbers that contract axis 0 of both operands:
#   (tb, td) x (tb, td) -> (td, td)   and   (1, td) x (1, td) -> (td, td)
_CONTRACT_AXIS0 = (((0,), (0,)), ((), ()))


def _bt_loss_kernel(lam_ref, *args, batch_norm, n_batch, n_feat, td, tb,
                    h1_resident):
    if batch_norm:
        (mu1_ref, inv1_ref, mu2_ref, inv2_ref,
         h1_ref, h2_ref, out_ref, g_acc) = args
    else:
        h1_ref, h2_ref, out_ref, g_acc = args

    i = pl.program_id(0)          # h1-feature tile (rows of c)
    j = pl.program_id(1)          # h2-feature tile (cols of c)
    k = pl.program_id(2)          # batch chunk (reduction axis, innermost)
    nk = pl.num_programs(2)

    @pl.when(k == 0)
    def _init():
        g_acc[...] = jnp.zeros_like(g_acc)

    if h1_resident:
        # h1 panel (Bp, td) stays resident across j and k; slice the batch chunk.
        start = pl.multiple_of(k * tb, tb)
        a = h1_ref[pl.ds(start, tb), :]          # (tb, td)
    else:
        a = h1_ref[...]                          # (tb, td) streamed block
    b = h2_ref[...]                              # (tb, td) streamed block

    # Raw Gram accumulation: contract the batch axis directly on the MXU.
    g_acc[...] += jax.lax.dot_general(
        a, b, dimension_numbers=_CONTRACT_AXIS0,
        preferred_element_type=jnp.float32)

    @pl.when(k == nk - 1)
    def _epilogue():
        lam = lam_ref[0]
        inv_n = 1.0 / n_batch

        if batch_norm:
            def outer(u, v):      # (1,td) x (1,td) -> (td,td) rank-1 via MXU
                return jax.lax.dot_general(
                    u, v, dimension_numbers=_CONTRACT_AXIS0,
                    preferred_element_type=jnp.float32)
            # c[p,q] = (G[p,q]/B - mu1[p]*mu2[q]) * inv1[p] * inv2[q]
            c = ((g_acc[...] * inv_n - outer(mu1_ref[...], mu2_ref[...]))
                 * outer(inv1_ref[...], inv2_ref[...]))
        else:
            c = g_acc[...] * inv_n

        csq = c * c
        total = jnp.sum(csq)
        # Off-diagonal-only tiles need just lambda * sum(c^2) (no masks at all).
        out_ref[...] = jnp.full((8, 128), lam * total, dtype=jnp.float32)

        @pl.when(i == j)
        def _diag_tile():
            # This tile carries (part of) the diagonal: fix up its contribution.
            rows = jax.lax.broadcasted_iota(jnp.int32, (td, td), 0)
            cols = jax.lax.broadcasted_iota(jnp.int32, (td, td), 1)
            # Only real (non-padded) features contribute to the diagonal term.
            diag_ok = jnp.logical_and(rows == cols, i * td + rows < n_feat)
            # diag_loss + lam*(total - diag_sq) == lam*total + sum_diag[(1-c)^2 - lam*c^2]
            adj = jnp.sum(jnp.where(diag_ok, (1.0 - c) ** 2 - lam * csq, 0.0))
            out_ref[...] = jnp.full((8, 128), lam * total + adj,
                                    dtype=jnp.float32)


def _choose_tiles(B, D, itemsize, block_d, block_b, h1_resident, vmem_budget):
    """Pick (td, tb, resident) that fit the per-chip VMEM budget."""
    td = min(_round_up(block_d, 128), _round_up(D, 128))
    tb = min(_round_up(block_b, 8), _round_up(B, 8))

    def est(td_, tb_, resident_):
        bp = _round_up(B, tb_)
        h1_bytes = 2 * (bp if resident_ else tb_) * td_ * itemsize   # dbl-buffered
        h2_bytes = 2 * tb_ * td_ * itemsize                          # dbl-buffered
        acc_bytes = td_ * td_ * 4                                    # f32 Gram acc
        epilogue = 3 * td_ * td_ * 4                                 # c/mask temporaries
        misc = 16 * td_ * 4 + 2 * 8 * 128 * 4 + (1 << 20)
        return h1_bytes + h2_bytes + acc_bytes + epilogue + misc

    resident = h1_resident
    if resident is None:
        resident = est(td, tb, True) <= vmem_budget

    while est(td, tb, resident) > vmem_budget:
        if resident and h1_resident is None:
            resident = False            # drop the resident panel first (auto mode)
        elif tb > 256:
            tb = max(256, ((tb // 2) // 8) * 8)
        elif td > 128:
            td = max(128, ((td // 2) // 128) * 128)
        elif tb > 8:
            tb = max(8, ((tb // 2) // 8) * 8)
        else:
            break
    return td, tb, resident, est(td, tb, resident)


def bt_loss_pallas(h1, h2, lambda_, batch_norm=True, eps=1e-15, mean=True,
                   block_d=1024, block_b=1024, h1_resident=None,
                   matmul_dtype=None):
    """Pallas TPU implementation of BTLoss.forward.  Returns a scalar float32.

    `mean` is accepted for API parity with the PyTorch module; the result is a
    scalar, so .mean() and .sum() are both the identity.
    `matmul_dtype=jnp.bfloat16` feeds the MXU bf16 operands (f32 accumulate).
    """
    assert h1.shape == h2.shape and h1.ndim == 2
    B, D = h1.shape
    if batch_norm and B < 2:
        raise ValueError("batch_norm=True needs batch size >= 2 (unbiased std).")

    # Per-chip VMEM budget (conservatively assume v7x's 64 MiB/TC if unknown).
    try:
        vmem_cap = int(getattr(pltpu.get_tpu_info(), "vmem_capacity_bytes",
                               64 << 20))
    except Exception:
        vmem_cap = 64 << 20
    vmem_budget = int(vmem_cap * 0.70)

    mxu_dtype = jnp.dtype(matmul_dtype) if matmul_dtype is not None else h1.dtype
    itemsize = jnp.dtype(mxu_dtype).itemsize
    td, tb, resident, est_bytes = _choose_tiles(
        B, D, itemsize, block_d, block_b, h1_resident, vmem_budget)

    Dp = _round_up(D, td)
    Bp = _round_up(B, tb)
    n_i, n_j, n_k = Dp // td, Dp // td, Bp // tb

    extra_inputs, extra_specs = [], []
    if batch_norm:
        # Exact two-pass per-feature statistics (matches torch.std, ddof=1),
        # computed once wrapper-side -> O(B*D) traffic, <1% of kernel reads.
        def stats(z):
            z32 = z.astype(jnp.float32)
            mu = jnp.mean(z32, axis=0)
            inv = 1.0 / (jnp.std(z32, axis=0, ddof=1) + eps)
            pad = Dp - D
            mu = jnp.pad(mu, (0, pad)).reshape(1, Dp)
            inv = jnp.pad(inv, (0, pad)).reshape(1, Dp)   # padded cols -> c == 0
            return mu, inv

        mu1, inv1 = stats(h1)
        mu2, inv2 = stats(h2)
        extra_inputs = [mu1, inv1, mu2, inv2]
        extra_specs = [
            pl.BlockSpec((1, td), lambda i, j, k, lam: (0, i)),   # mu1  (i-tile)
            pl.BlockSpec((1, td), lambda i, j, k, lam: (0, i)),   # inv1 (i-tile)
            pl.BlockSpec((1, td), lambda i, j, k, lam: (0, j)),   # mu2  (j-tile)
            pl.BlockSpec((1, td), lambda i, j, k, lam: (0, j)),   # inv2 (j-tile)
        ]

    if matmul_dtype is not None:
        h1 = h1.astype(mxu_dtype)
        h2 = h2.astype(mxu_dtype)
    if (Bp, Dp) != (B, D):
        # Zero padding contributes exactly 0 to the Gram; padded diagonal
        # entries are masked in the kernel, padded columns have inv_std == 0.
        h1 = jnp.pad(h1, ((0, Bp - B), (0, Dp - D)))
        h2 = jnp.pad(h2, ((0, Bp - B), (0, Dp - D)))

    if resident:
        h1_spec = pl.BlockSpec((Bp, td), lambda i, j, k, lam: (0, i))
    else:
        h1_spec = pl.BlockSpec((tb, td), lambda i, j, k, lam: (k, i))
    h2_spec = pl.BlockSpec((tb, td), lambda i, j, k, lam: (k, j))

    lam_arr = jnp.asarray([lambda_], dtype=jnp.float32)

    kernel = functools.partial(
        _bt_loss_kernel, batch_norm=batch_norm, n_batch=B, n_feat=D,
        td=td, tb=tb, h1_resident=resident)

    grid_spec = pltpu.PrefetchScalarGridSpec(
        num_scalar_prefetch=1,                       # lambda lives in SMEM
        grid=(n_i, n_j, n_k),                        # batch reduction axis last
        in_specs=extra_specs + [h1_spec, h2_spec],
        out_specs=pl.BlockSpec((8, 128), lambda i, j, k, lam: (i, j)),
        scratch_shapes=[pltpu.VMEM((td, td), jnp.float32)],   # Gram accumulator
    )

    vmem_limit = int(max(32 << 20,
                         min(int(vmem_cap * 0.75), est_bytes + (16 << 20))))
    hbm_bytes = ((1 if resident else n_j) + n_i) * Bp * Dp * itemsize

    partials = pl.pallas_call(
        kernel,
        grid_spec=grid_spec,
        out_shape=jax.ShapeDtypeStruct((n_i * 8, n_j * 128), jnp.float32),
        compiler_params=pltpu.CompilerParams(
            dimension_semantics=("parallel", "parallel", "arbitrary"),
            vmem_limit_bytes=vmem_limit),
        cost_estimate=pl.CostEstimate(
            flops=2 * Bp * Dp * Dp,
            transcendentals=0,
            bytes_accessed=hbm_bytes),
    )(lam_arr, *extra_inputs, h1, h2)

    # Each (i, j) tile broadcast its partial loss over its (8, 128) output
    # block; pick one representative per tile and sum.
    tile_losses = partials.reshape(n_i, 8, n_j, 128)[:, 0, :, 0]
    ret = jnp.sum(tile_losses)
    # ret is a scalar -> .mean() and .sum() are both identity, as in the module.
    return ret


def _bt_loss_ref(h1, h2, lambda_, batch_norm=True, eps=1e-15):
    # Pure-JAX reference mirroring the PyTorch bt_loss (sanity check only).
    B, D = h1.shape

    def norm(z):
        return (z - jnp.mean(z, axis=0)) / (jnp.std(z, axis=0, ddof=1) + eps)

    c = (norm(h1).T @ norm(h2) / B) if batch_norm else (h1.T @ h2 / B)
    eye = jnp.eye(D, dtype=bool)
    loss = jnp.sum((1.0 - jnp.diagonal(c)) ** 2)
    loss = loss + lambda_ * jnp.sum(jnp.where(eye, 0.0, c) ** 2)
    return loss


if __name__ == "__main__":
    key = jax.random.PRNGKey(0)
    k1, k2, k3, k4 = jax.random.split(key, 4)
    lam = 0.005

    # Test 1: module-sized toy shape (batch=8, feature=32): single-tile grid,
    # resident-h1 fast path, batch_norm=True.
    h1 = jax.random.normal(k1, (8, 32), dtype=jnp.float32)
    h2 = jax.random.normal(k2, (8, 32), dtype=jnp.float32)
    out = jax.block_until_ready(
        bt_loss_pallas(h1, h2, lam, batch_norm=True, eps=1e-15, mean=True))
    ref = 0.5 * (_bt_loss_ref(h1, h2, lam) + _bt_loss_ref(h2, h1, lam))
    assert jnp.allclose(out, ref, rtol=2e-3, atol=2e-3), (out, ref)

    # Test 2: multi-tile grid (2x2x2) with feature padding (160 -> 256) and
    # the streamed-h1 fallback path.
    g1 = jax.random.normal(k3, (16, 160), dtype=jnp.float32)
    g2 = jax.random.normal(k4, (16, 160), dtype=jnp.float32)
    out2 = jax.block_until_ready(
        bt_loss_pallas(g1, g2, lam, block_d=128, block_b=8, h1_resident=False))
    ref2 = 0.5 * (_bt_loss_ref(g1, g2, lam) + _bt_loss_ref(g2, g1, lam))
    assert jnp.allclose(out2, ref2, rtol=2e-3, atol=2e-3), (out2, ref2)

    # Test 3: batch_norm=False path (raw cross-correlation).
    out3 = jax.block_until_ready(
        bt_loss_pallas(h1, h2, lam, batch_norm=False))
    ref3 = 0.5 * (_bt_loss_ref(h1, h2, lam, batch_norm=False)
                  + _bt_loss_ref(h2, h1, lam, batch_norm=False))
    assert jnp.allclose(out3, ref3, rtol=2e-3, atol=2e-3), (out3, ref3)

    # Test 4: bf16 MXU operands (v5e/v6e/v7x fast path), f32 accumulate/epilogue.
    out4 = jax.block_until_ready(
        bt_loss_pallas(g1, g2, lam, block_d=128, block_b=8,
                       matmul_dtype=jnp.bfloat16))
    assert jnp.allclose(out4, ref2, rtol=5e-2, atol=5e-2), (out4, ref2)

    print("KERNEL_OK")
</pallas_src>

<mosaic_0001>
module attributes {stable_mosaic.version = 11 : i64} {
  func.func @_bt_loss_kernel(%arg0: i32, %arg1: i32, %arg2: i32, %arg3: memref<1xf32, #tpu.memory_space<smem>>, %arg4: memref<1x128xf32, #tpu.memory_space<vmem>>, %arg5: memref<1x128xf32, #tpu.memory_space<vmem>>, %arg6: memref<1x128xf32, #tpu.memory_space<vmem>>, %arg7: memref<1x128xf32, #tpu.memory_space<vmem>>, %arg8: memref<8x128xf32, #tpu.memory_space<vmem>>, %arg9: memref<8x128xf32, #tpu.memory_space<vmem>>, %arg10: memref<8x128xf32, #tpu.memory_space<vmem>>, %arg11: memref<128x128xf32, #tpu.memory_space<vmem>>) attributes {dimension_semantics = [#tpu.dimension_semantics<parallel>, #tpu.dimension_semantics<parallel>, #tpu.dimension_semantics<arbitrary>], iteration_bounds = array<i64: 1, 1, 1>, scalar_prefetch = 1 : i64, scratch_operands = 1 : i64, tpu.core_type = #tpu.core_type<tc>, window_params = [{transform_indices = @transform_0, window_bounds = array<i64: 1, 128>}, {transform_indices = @transform_1, window_bounds = array<i64: 1, 128>}, {transform_indices = @transform_2, window_bounds = array<i64: 1, 128>}, {transform_indices = @transform_3, window_bounds = array<i64: 1, 128>}, {transform_indices = @transform_4, window_bounds = array<i64: 8, 128>}, {transform_indices = @transform_5, window_bounds = array<i64: 8, 128>}, {transform_indices = @transform_6, window_bounds = array<i64: 8, 128>}]} {
    %c0_i32 = arith.constant 0 : i32
    %0 = arith.cmpi eq, %arg2, %c0_i32 : i32
    %1 = arith.extui %0 : i1 to i32
    %c0_i32_0 = arith.constant 0 : i32
    %2 = arith.cmpi ne, %1, %c0_i32_0 : i32
    scf.if %2 {
      %cst_9 = arith.constant 0.000000e+00 : f32
      %15 = vector.broadcast %cst_9 : f32 to vector<128x128xf32>
      %c0_10 = arith.constant 0 : index
      %c0_11 = arith.constant 0 : index
      %16 = vector.load %arg11[%c0_10, %c0_11] : memref<128x128xf32, #tpu.memory_space<vmem>>, vector<128x128xf32>
      tpu.vector_store %arg11[%c0_10, %c0_11], %15 {strides = array<i32>} : memref<128x128xf32, #tpu.memory_space<vmem>>, vector<128x128xf32>,
    } else {
    }
    %c8_i32 = arith.constant 8 : i32
    %3 = arith.muli %arg2, %c8_i32 : i32
    %4 = tpu.assume_multiple %3, 8 : i32
    %5 = arith.index_cast %4 : i32 to index
    %c0 = arith.constant 0 : index
    %6 = vector.load %arg8[%5, %c0] : memref<8x128xf32, #tpu.memory_space<vmem>>, vector<8x128xf32>
    %c0_1 = arith.constant 0 : index
    %c0_2 = arith.constant 0 : index
    %7 = vector.load %arg9[%c0_1, %c0_2] : memref<8x128xf32, #tpu.memory_space<vmem>>, vector<8x128xf32>
    %c0_3 = arith.constant 0 : index
    %c0_4 = arith.constant 0 : index
    %8 = vector.load %arg11[%c0_3, %c0_4] : memref<128x128xf32, #tpu.memory_space<vmem>>, vector<128x128xf32>
    %cst = arith.constant dense<0.000000e+00> : vector<128x128xf32>
    %9 = tpu.matmul %6, %7, %cst {dimension_numbers = #tpu.dot_dimension_numbers<[0], [0], [1], [1], [0, 1, 1, 1], [], []>} : vector<8x128xf32>, vector<8x128xf32>, vector<128x128xf32> -> vector<128x128xf32>
    %10 = arith.addf %8, %9 : vector<128x128xf32>
    %c0_5 = arith.constant 0 : index
    %c0_6 = arith.constant 0 : index
    %11 = vector.load %arg11[%c0_5, %c0_6] : memref<128x128xf32, #tpu.memory_space<vmem>>, vector<128x128xf32>
    tpu.vector_store %arg11[%c0_5, %c0_6], %10 {strides = array<i32>} : memref<128x128xf32, #tpu.memory_space<vmem>>, vector<128x128xf32>,
    %c0_i32_7 = arith.constant 0 : i32
    %12 = arith.cmpi eq, %arg2, %c0_i32_7 : i32
    %13 = arith.extui %12 : i1 to i32
    %c0_i32_8 = arith.constant 0 : i32
    %14 = arith.cmpi ne, %13, %c0_i32_8 : i32
    scf.if %14 {
      %c0_9 = arith.constant 0 : index
      %15 = memref.load %arg3[%c0_9] : memref<1xf32, #tpu.memory_space<smem>>
      %c0_10 = arith.constant 0 : index
      %c0_11 = arith.constant 0 : index
      %16 = vector.load %arg11[%c0_10, %c0_11] : memref<128x128xf32, #tpu.memory_space<vmem>>, vector<128x128xf32>
      %cst_12 = arith.constant 1.250000e-01 : f32
      %17 = vector.broadcast %cst_12 : f32 to vector<128x128xf32>
      %18 = arith.mulf %16, %17 : vector<128x128xf32>
      %c0_13 = arith.constant 0 : index
      %c0_14 = arith.constant 0 : index
      %19 = vector.load %arg4[%c0_13, %c0_14] : memref<1x128xf32, #tpu.memory_space<vmem>>, vector<1x128xf32>
      %c0_15 = arith.constant 0 : index
      %c0_16 = arith.constant 0 : index
      %20 = vector.load %arg6[%c0_15, %c0_16] : memref<1x128xf32, #tpu.memory_space<vmem>>, vector<1x128xf32>
      %cst_17 = arith.constant dense<0.000000e+00> : vector<128x128xf32>
      %21 = tpu.matmul %19, %20, %cst_17 {dimension_numbers = #tpu.dot_dimension_numbers<[0], [0], [1], [1], [0, 1, 1, 1], [], []>} : vector<1x128xf32>, vector<1x128xf32>, vector<128x128xf32> -> vector<128x128xf32>
      %22 = arith.subf %18, %21 : vector<128x128xf32>
      %c0_18 = arith.constant 0 : index
      %c0_19 = arith.constant 0 : index
      %23 = vector.load %arg5[%c0_18, %c0_19] : memref<1x128xf32, #tpu.memory_space<vmem>>, vector<1x128xf32>
      %c0_20 = arith.constant 0 : index
      %c0_21 = arith.constant 0 : index
      %24 = vector.load %arg7[%c0_20, %c0_21] : memref<1x128xf32, #tpu.memory_space<vmem>>, vector<1x128xf32>
      %cst_22 = arith.constant dense<0.000000e+00> : vector<128x128xf32>
      %25 = tpu.matmul %23, %24, %cst_22 {dimension_numbers = #tpu.dot_dimension_numbers<[0], [0], [1], [1], [0, 1, 1, 1], [], []>} : vector<1x128xf32>, vector<1x128xf32>, vector<128x128xf32> -> vector<128x128xf32>
      %26 = arith.mulf %22, %25 : vector<128x128xf32>
      %27 = arith.mulf %26, %26 : vector<128x128xf32>
      %28 = vector.shape_cast %27 : vector<128x128xf32> to vector<1x128x128xf32>
      %cst_23 = arith.constant dense<0.000000e+00> : vector<1xf32>
      %29 = vector.multi_reduction <add>, %28, %cst_23 [1, 2] : vector<1x128x128xf32> to vector<1xf32>
      %30 = vector.shape_cast %29 : vector<1xf32> to vector<1x1x1xf32>
      %31 = vector.extract %30[0, 0, 0] : f32 from vector<1x1x1xf32>
      %32 = arith.mulf %15, %31 : f32
      %33 = vector.broadcast %32 : f32 to vector<8x128xf32>
      %c0_24 = arith.constant 0 : index
      %c0_25 = arith.constant 0 : index
      %34 = vector.load %arg10[%c0_24, %c0_25] : memref<8x128xf32, #tpu.memory_space<vmem>>, vector<8x128xf32>
      tpu.vector_store %arg10[%c0_24, %c0_25], %33 {strides = array<i32>} : memref<8x128xf32, #tpu.memory_space<vmem>>, vector<8x128xf32>,
      %35 = arith.cmpi eq, %arg0, %arg1 : i32
      %36 = arith.extui %35 : i1 to i32
      %c0_i32_26 = arith.constant 0 : i32
      %37 = arith.cmpi ne, %36, %c0_i32_26 : i32
      scf.if %37 {
        %38 = tpu.iota {dimensions = array<i32: 0>} : vector<128x128xi32>
        %39 = tpu.iota {dimensions = array<i32: 1>} : vector<128x128xi32>
        %40 = arith.cmpi eq, %38, %39 : vector<128x128xi32>
        %c128_i32 = arith.constant 128 : i32
        %41 = arith.muli %arg0, %c128_i32 : i32
        %42 = vector.broadcast %41 : i32 to vector<128x128xi32>
        %43 = arith.addi %42, %38 : vector<128x128xi32>
        %c32_i32 = arith.constant 32 : i32
        %44 = vector.broadcast %c32_i32 : i32 to vector<128x128xi32>
        %45 = arith.cmpi slt, %43, %44 : vector<128x128xi32>
        %46 = arith.andi %40, %45 : vector<128x128xi1>
        %cst_27 = arith.constant 1.000000e+00 : f32
        %47 = vector.broadcast %cst_27 : f32 to vector<128x128xf32>
        %48 = arith.subf %47, %26 : vector<128x128xf32>
        %49 = arith.mulf %48, %48 : vector<128x128xf32>
        %50 = vector.broadcast %15 : f32 to vector<128x128xf32>
        %51 = arith.mulf %50, %27 : vector<128x128xf32>
        %52 = arith.subf %49, %51 : vector<128x128xf32>
        %cst_28 = arith.constant 0.000000e+00 : f32
        %53 = vector.broadcast %cst_28 : f32 to vector<128x128xf32>
        %54 = arith.select %46, %52, %53 : vector<128x128xi1>, vector<128x128xf32>
        %55 = vector.shape_cast %54 : vector<128x128xf32> to vector<1x128x128xf32>
        %cst_29 = arith.constant dense<0.000000e+00> : vector<1xf32>
        %56 = vector.multi_reduction <add>, %55, %cst_29 [1, 2] : vector<1x128x128xf32> to vector<1xf32>
        %57 = vector.shape_cast %56 : vector<1xf32> to vector<1x1x1xf32>
        %58 = vector.extract %57[0, 0, 0] : f32 from vector<1x1x1xf32>
        %59 = arith.mulf %15, %31 : f32
        %60 = arith.addf %59, %58 : f32
        %61 = vector.broadcast %60 : f32 to vector<8x128xf32>
        %c0_30 = arith.constant 0 : index
        %c0_31 = arith.constant 0 : index
        %62 = vector.load %arg10[%c0_30, %c0_31] : memref<8x128xf32, #tpu.memory_space<vmem>>, vector<8x128xf32>
        tpu.vector_store %arg10[%c0_30, %c0_31], %61 {strides = array<i32>} : memref<8x128xf32, #tpu.memory_space<vmem>>, vector<8x128xf32>,
      } else {
      }
    } else {
    }
    return
  }
  func.func @transform_0(%arg0: i32, %arg1: i32, %arg2: i32, %arg3: memref<1xf32, #tpu.memory_space<smem>>) -> (i32, i32) {
    %c0_i32 = arith.constant 0 : i32
    %c0_i32_0 = arith.constant 0 : i32
    return %c0_i32, %arg0 : i32, i32
  }
  func.func @transform_1(%arg0: i32, %arg1: i32, %arg2: i32, %arg3: memref<1xf32, #tpu.memory_space<smem>>) -> (i32, i32) {
    %c0_i32 = arith.constant 0 : i32
    %c0_i32_0 = arith.constant 0 : i32
    return %c0_i32, %arg0 : i32, i32
  }
  func.func @transform_2(%arg0: i32, %arg1: i32, %arg2: i32, %arg3: memref<1xf32, #tpu.memory_space<smem>>) -> (i32, i32) {
    %c0_i32 = arith.constant 0 : i32
    %c0_i32_0 = arith.constant 0 : i32
    return %c0_i32, %arg1 : i32, i32
  }
  func.func @transform_3(%arg0: i32, %arg1: i32, %arg2: i32, %arg3: memref<1xf32, #tpu.memory_space<smem>>) -> (i32, i32) {
    %c0_i32 = arith.constant 0 : i32
    %c0_i32_0 = arith.constant 0 : i32
    return %c0_i32, %arg1 : i32, i32
  }
  func.func @transform_4(%arg0: i32, %arg1: i32, %arg2: i32, %arg3: memref<1xf32, #tpu.memory_space<smem>>) -> (i32, i32) {
    %c0_i32 = arith.constant 0 : i32
    %c0_i32_0 = arith.constant 0 : i32
    return %c0_i32, %arg0 : i32, i32
  }
  func.func @transform_5(%arg0: i32, %arg1: i32, %arg2: i32, %arg3: memref<1xf32, #tpu.memory_space<smem>>) -> (i32, i32) {
    %c0_i32 = arith.constant 0 : i32
    return %arg2, %arg1 : i32, i32
  }
  func.func @transform_6(%arg0: i32, %arg1: i32, %arg2: i32, %arg3: memref<1xf32, #tpu.memory_space<smem>>) -> (i32, i32) {
    %c0_i32 = arith.constant 0 : i32
    return %arg0, %arg1 : i32, i32
  }
}

</mosaic_0001>

<llo_original>
// kernel: tpu_custom_call.1
$region0: #{tpu_custom_call.1}
  #allocation0 [shape = 'u32[]', space=smem, size = 0x4, offset = 0x4, fixed_abs, tag = 'smem constant byte address 0x4 - core index']
  #allocation1 [shape = 'u32[144,128]{1,0:T(1,128)}', space=vmem, size = 0x12000, scoped, tag = 'internal scratch']
  #allocation2 [shape = 'f32[128,128]{1,0:T(8,128)}', space=vmem, size = 0x10000, scoped, tag = 'scratch operand']
  #allocation3 [shape = 's32[1]{0}', space=sflag, size = 0x4, scoped, tag = 'scoped memory for tpu_custom_call.1']
  #allocation4 [shape = 'f32[1]{0:T(128)S(6)}', space=smem, size = 0x200, scoped, tag = 'prefetched SMEM operand 0']
  %s0 = inlined_call_operand.<no memory space> [shape: f32[1], index: 0, kind: input, shape index: {}]
  %s1 = inlined_call_operand.vmem [shape: f32[1,128], index: 1, kind: input, shape index: {}]
  %s2 = inlined_call_operand.vmem [shape: f32[1,128], index: 2, kind: input, shape index: {}]
  %s3 = inlined_call_operand.hbm [shape: f32[1,128], index: 3, kind: input, shape index: {}]
  %s4 = inlined_call_operand.hbm [shape: f32[1,128], index: 4, kind: input, shape index: {}]
  %s5 = inlined_call_operand.vmem [shape: f32[8,128], index: 5, kind: input, shape index: {}]
  %s6 = inlined_call_operand.vmem [shape: f32[8,128], index: 6, kind: input, shape index: {}]
  %s7 = inlined_call_operand.hbm [shape: f32[8,128], index: 7, kind: output, shape index: {}]
  %s8 = sld [smem:[#allocation0]]
  $region54: #{tpu_custom_call.1} parent=0
    _
  %s10 = ssub.s32 1, %s8
  %s11 = scalar_select 0, %s10, %s8
  %12 = sst [smem:[#allocation4]] %s0
  $region1: #{tpu_custom_call.1} parent=0
    #allocation5 [shape = 'u8[512]{0}', space=vmem, size = 0x400, scoped, tag = 'input window, operand 3, single buffered']
    #allocation6 [shape = 's32[1]{0}', space=sflag, size = 0x4, scoped, tag = 'scoped memory for tpu_custom_call.1']
    #allocation7 [shape = 's32[1]{0}', space=sflag, size = 0x4, scoped, tag = 'scoped memory for tpu_custom_call.1']
    #allocation8 [shape = 'u8[512]{0}', space=vmem, size = 0x400, scoped, tag = 'input window, operand 4, single buffered']
    #allocation9 [shape = 's32[1]{0}', space=sflag, size = 0x4, scoped, tag = 'scoped memory for tpu_custom_call.1']
    #allocation10 [shape = 'u8[4096]{0}', space=vmem, size = 0x1000, scoped, tag = 'output window, operand 0, single buffered']
    %13 = vsyncpa [#allocation6], 0
    %14 = vsyncpa [#allocation9], 0
    %15 = vsyncpa [#allocation7], 0
    // Predicated region
    $region2: #{tpu_custom_call.1} parent=1 // pred_check
      _
    $region3: #{tpu_custom_call.1} parent=1 // pred_check_branch
      %17 = sbr.rel (0) target = $region5
    $region4: #{tpu_custom_call.1} parent=1 // pred_region
      _
    $region5: #{tpu_custom_call.1} parent=1 // pred_fallthru
      _
    // Predicated region
    $region6: #{tpu_custom_call.1} parent=1 // pred_check
      _
    $region7: #{tpu_custom_call.1} parent=1 // pred_check_branch
      %19 = sbr.rel (0) target = $region9
    $region8: #{tpu_custom_call.1} parent=1 // pred_region
      _
    $region9: #{tpu_custom_call.1} parent=1 // pred_fallthru
      _
    // Predicated region
    $region10: #{tpu_custom_call.1} parent=1 // pred_check
      _
    $region11: #{tpu_custom_call.1} parent=1 // pred_check_branch
      %21 = sbr.rel (0) target = $region13
    $region12: #{tpu_custom_call.1} parent=1 // pred_region
      %s23 = ssub.s32 16, 16
      %24 = vsyncadd [#allocation6], %s23
      %s26 = sshll.u32 [#allocation5], 4
      %s27 = int_to_ptr.vmem [resolvable:$true] %s26
      %29 = dma.hbm_to_vmem [thread:$0]  %s3, 16, %s27, [#allocation6]
    $region13: #{tpu_custom_call.1} parent=1 // pred_fallthru
      _
    // Predicated region
    $region14: #{tpu_custom_call.1} parent=1 // pred_check
      _
    $region15: #{tpu_custom_call.1} parent=1 // pred_check_branch
      %31 = sbr.rel (0) target = $region17
    $region16: #{tpu_custom_call.1} parent=1 // pred_region
      %s33 = ssub.s32 16, 16
      %34 = vsyncadd [#allocation9], %s33
      %s36 = sshll.u32 [#allocation8], 4
      %s37 = int_to_ptr.vmem [resolvable:$true] %s36
      %39 = dma.hbm_to_vmem [thread:$0]  %s4, 16, %s37, [#allocation9]
    $region17: #{tpu_custom_call.1} parent=1 // pred_fallthru
      _
    // Predicated region
    $region18: #{tpu_custom_call.1} parent=1 // pred_check
      _
    $region19: #{tpu_custom_call.1} parent=1 // pred_check_branch
      %41 = sbr.rel (0) target = $region21
    $region20: #{tpu_custom_call.1} parent=1 // pred_region
      _
    $region21: #{tpu_custom_call.1} parent=1 // pred_fallthru
      _
    // Predicated region
    $region22: #{tpu_custom_call.1} parent=1 // pred_check
      _
    $region23: #{tpu_custom_call.1} parent=1 // pred_check_branch
      %43 = sbr.rel (0) target = $region25
    $region24: #{tpu_custom_call.1} parent=1 // pred_region
      _
    $region25: #{tpu_custom_call.1} parent=1 // pred_fallthru
      _
    // Predicated region
    $region26: #{tpu_custom_call.1} parent=1 // pred_check
      _
    $region27: #{tpu_custom_call.1} parent=1 // pred_check_branch
      %45 = sbr.rel (0) target = $region29
    $region28: #{tpu_custom_call.1} parent=1 // pred_region
      %46 = dma.done [#allocation6], 16
    $region29: #{tpu_custom_call.1} parent=1 // pred_fallthru
      _
    // Predicated region
    $region30: #{tpu_custom_call.1} parent=1 // pred_check
      _
    $region31: #{tpu_custom_call.1} parent=1 // pred_check_branch
      %48 = sbr.rel (0) target = $region33
    $region32: #{tpu_custom_call.1} parent=1 // pred_region
      %49 = dma.done [#allocation9], 16
    $region33: #{tpu_custom_call.1} parent=1 // pred_fallthru
      _
    %p50 = scmp.eq.s32.totalorder 0, 0
    // Predicated region
    $region34: #{tpu_custom_call.1} parent=1 // pred_check
      %p51 = pneg %p50
    $region35: #{tpu_custom_call.1} parent=1 // pred_check_branch
      %53 = sbr.rel (%p51) target = $region37
    $region36: #{tpu_custom_call.1} parent=1 // pred_region
      %54 = vst [vmem:[#allocation2] sm:$0xff] 0.0
      %55 = vst [vmem:[#allocation2 + $0x8] sm:$0xff] 0.0
      %56 = vst [vmem:[#allocation2 + $0x10] sm:$0xff] 0.0
      %57 = vst [vmem:[#allocation2 + $0x18] sm:$0xff] 0.0
      %58 = vst [vmem:[#allocation2 + $0x20] sm:$0xff] 0.0
      %59 = vst [vmem:[#allocation2 + $0x28] sm:$0xff] 0.0
      %60 = vst [vmem:[#allocation2 + $0x30] sm:$0xff] 0.0
      %61 = vst [vmem:[#allocation2 + $0x38] sm:$0xff] 0.0
      %62 = vst [vmem:[#allocation2 + $0x40] sm:$0xff] 0.0
      %63 = vst [vmem:[#allocation2 + $0x48] sm:$0xff] 0.0
      %64 = vst [vmem:[#allocation2 + $0x50] sm:$0xff] 0.0
      %65 = vst [vmem:[#allocation2 + $0x58] sm:$0xff] 0.0
      %66 = vst [vmem:[#allocation2 + $0x60] sm:$0xff] 0.0
      %67 = vst [vmem:[#allocation2 + $0x68] sm:$0xff] 0.0
      %68 = vst [vmem:[#allocation2 + $0x70] sm:$0xff] 0.0
      %69 = vst [vmem:[#allocation2 + $0x78] sm:$0xff] 0.0
    $region37: #{tpu_custom_call.1} parent=1 // pred_fallthru
      _
    %s70 = smul.u32 0, 8
    %s71 = scalar_lea.vmem %s5, %s70
    %v72 = vld [vmem:[%s71] sm:$0xff]
    %v73 = vld [vmem:[%s6] sm:$0xff]
    %v74 = vld [vmem:[#allocation2] sm:$0xff]
    %v75 = vld [vmem:[#allocation2 + $0x8] sm:$0xff]
    %v76 = vld [vmem:[#allocation2 + $0x10] sm:$0xff]
    %v77 = vld [vmem:[#allocation2 + $0x18] sm:$0xff]
    %v78 = vld [vmem:[#allocation2 + $0x20] sm:$0xff]
    %v79 = vld [vmem:[#allocation2 + $0x28] sm:$0xff]
    %v80 = vld [vmem:[#allocation2 + $0x30] sm:$0xff]
    %v81 = vld [vmem:[#allocation2 + $0x38] sm:$0xff]
    %v82 = vld [vmem:[#allocation2 + $0x40] sm:$0xff]
    %v83 = vld [vmem:[#allocation2 + $0x48] sm:$0xff]
    %v84 = vld [vmem:[#allocation2 + $0x50] sm:$0xff]
    %v85 = vld [vmem:[#allocation2 + $0x58] sm:$0xff]
    %v86 = vld [vmem:[#allocation2 + $0x60] sm:$0xff]
    %v87 = vld [vmem:[#allocation2 + $0x68] sm:$0xff]
    %v88 = vld [vmem:[#allocation2 + $0x70] sm:$0xff]
    %v89 = vld [vmem:[#allocation2 + $0x78] sm:$0xff]
    %90 = vxpose.xlu0.b32.start [1/16] %v72, 128
    %91 = vxpose.xlu0.b32.cont [2/16] 0.0, 128
    %92 = vxpose.xlu0.b32.cont [3/16] 0.0, 128
    %93 = vxpose.xlu0.b32.cont [4/16] 0.0, 128
    %94 = vxpose.xlu0.b32.cont [5/16] 0.0, 128
    %95 = vxpose.xlu0.b32.cont [6/16] 0.0, 128
    %96 = vxpose.xlu0.b32.cont [7/16] 0.0, 128
    %97 = vxpose.xlu0.b32.cont [8/16] 0.0, 128
    %98 = vxpose.xlu0.b32.cont [9/16] 0.0, 128
    %99 = vxpose.xlu0.b32.cont [10/16] 0.0, 128
    %100 = vxpose.xlu0.b32.cont [11/16] 0.0, 128
    %101 = vxpose.xlu0.b32.cont [12/16] 0.0, 128
    %102 = vxpose.xlu0.b32.cont [13/16] 0.0, 128
    %103 = vxpose.xlu0.b32.cont [14/16] 0.0, 128
    %104 = vxpose.xlu0.b32.cont [15/16] 0.0, 128
    %105 = vxpose.xlu0.b32.end [16/16] 0.0, 128
    %v106 = vpop.trf.xlu0
    %v107 = vpop.trf.xlu0
    %v108 = vpop.trf.xlu0
    %v109 = vpop.trf.xlu0
    %v110 = vpop.trf.xlu0
    %v111 = vpop.trf.xlu0
    %v112 = vpop.trf.xlu0
    %v113 = vpop.trf.xlu0
    %v114 = vpop.trf.xlu0
    %v115 = vpop.trf.xlu0
    %v116 = vpop.trf.xlu0
    %v117 = vpop.trf.xlu0
    %v118 = vpop.trf.xlu0
    %v119 = vpop.trf.xlu0
    %v120 = vpop.trf.xlu0
    %v121 = vpop.trf.xlu0
    %vm122 = vcmask 64512
    %v124 = vsel %vm122, %v106, 0
    %v127 = vsel %vm122, %v107, 0
    %v130 = vsel %vm122, %v108, 0
    %v133 = vsel %vm122, %v109, 0
    %v136 = vsel %vm122, %v110, 0
    %v139 = vsel %vm122, %v111, 0
    %v142 = vsel %vm122, %v112, 0
    %v145 = vsel %vm122, %v113, 0
    %v148 = vsel %vm122, %v114, 0
    %v151 = vsel %vm122, %v115, 0
    %v154 = vsel %vm122, %v116, 0
    %v157 = vsel %vm122, %v117, 0
    %v160 = vsel %vm122, %v118, 0
    %v163 = vsel %vm122, %v119, 0
    %v166 = vsel %vm122, %v120, 0
    %v169 = vsel %vm122, %v121, 0
    %171 = vmatprep.subr.mxu0 0.0
    %172 = vmatpush1.msra.mxu0 %v73
    %173 = vmatprep.subr.mxu0 0.0
    %174 = vmatpush1.msra.mxu0 0.0
    %175 = vmatprep.subr.mxu0 0.0
    %176 = vmatpush1.msra.mxu0 0.0
    %177 = vmatprep.subr.mxu0 0.0
    %178 = vmatpush1.msra.mxu0 0.0
    %179 = vmatprep.subr.mxu0 0.0
    %180 = vmatpush1.msra.mxu0 0.0
    %181 = vmatprep.subr.mxu0 0.0
    %182 = vmatpush1.msra.mxu0 0.0
    %183 = vmatprep.subr.mxu0 0.0
    %184 = vmatpush1.msra.mxu0 0.0
    %185 = vmatprep.subr.mxu0 0.0
    %186 = vmatpush1.msra.mxu0 0.0
    %187 = vmatprep.subr.mxu0 0.0
    %188 = vmatpush1.msra.mxu0 0.0
    %189 = vmatprep.subr.mxu0 0.0
    %190 = vmatpush1.msra.mxu0 0.0
    %191 = vmatprep.subr.mxu0 0.0
    %192 = vmatpush1.msra.mxu0 0.0
    %193 = vmatprep.subr.mxu0 0.0
    %194 = vmatpush1.msra.mxu0 0.0
    %195 = vmatprep.subr.mxu0 0.0
    %196 = vmatpush1.msra.mxu0 0.0
    %197 = vmatprep.subr.mxu0 0.0
    %198 = vmatpush1.msra.mxu0 0.0
    %199 = vmatprep.subr.mxu0 0.0
    %200 = vmatpush1.msra.mxu0 0.0
    %201 = vmatprep.subr.mxu0 0.0
    %202 = vmatpush1.msra.mxu0 0.0
    %203 = vmatprep.subr.mxu0 0.0
    %204 = vmatpush1.msra.mxu0 0.0
    %205 = vmatprep.subr.mxu0 0.0
    %206 = vmatpush1.msra.mxu0 0.0
    %207 = vmatprep.subr.mxu0 0.0
    %208 = vmatpush1.msra.mxu0 0.0
    %209 = vmatprep.subr.mxu0 0.0
    %210 = vmatpush1.msra.mxu0 0.0
    %211 = vmatprep.subr.mxu0 0.0
    %212 = vmatpush1.msra.mxu0 0.0
    %213 = vmatprep.subr.mxu0 0.0
    %214 = vmatpush1.msra.mxu0 0.0
    %215 = vmatprep.subr.mxu0 0.0
    %216 = vmatpush1.msra.mxu0 0.0
    %217 = vmatprep.subr.mxu0 0.0
    %218 = vmatpush1.msra.mxu0 0.0
    %219 = vmatprep.subr.mxu0 0.0
    %220 = vmatpush1.msra.mxu0 0.0
    %221 = vmatprep.subr.mxu0 0.0
    %222 = vmatpush1.msra.mxu0 0.0
    %223 = vmatprep.subr.mxu0 0.0
    %224 = vmatpush1.msra.mxu0 0.0
    %225 = vmatprep.subr.mxu0 0.0
    %226 = vmatpush1.msra.mxu0 0.0
    %227 = vmatprep.subr.mxu0 0.0
    %228 = vmatpush1.msra.mxu0 0.0
    %229 = vmatprep.subr.mxu0 0.0
    %230 = vmatpush1.msra.mxu0 0.0
    %231 = vmatprep.subr.mxu0 0.0
    %232 = vmatpush1.msra.mxu0 0.0
    %233 = vmatprep.subr.mxu0 0.0
    %234 = vmatpush1.msra.mxu0 0.0
    %235 = vmatprep.mubr.f32.mxu0 0.0
    %236 = vmatmul.mubr.f32.gmra.mrb[0].mxu0 %v124
    %v237 = vpop.f32.mrb[0].mxu0
    %v238 = vadd.f32 0.0, %v237
    %v239 = vpop.f32.mrb[0].mxu0
    %240 = vmatprep.mubr.f32.mxu0 0.0
    %241 = vmatmul.mubr.f32.gmra.mrb[0].mxu0 %v127
    %v242 = vpop.f32.mrb[0].mxu0
    %v243 = vadd.f32 0.0, %v242
    %v244 = vpop.f32.mrb[0].mxu0
    %245 = vmatprep.mubr.f32.mxu0 0.0
    %246 = vmatmul.mubr.f32.gmra.mrb[0].mxu0 %v130
    %v247 = vpop.f32.mrb[0].mxu0
    %v248 = vadd.f32 0.0, %v247
    %v249 = vpop.f32.mrb[0].mxu0
    %250 = vmatprep.mubr.f32.mxu0 0.0
    %251 = vmatmul.mubr.f32.gmra.mrb[0].mxu0 %v133
    %v252 = vpop.f32.mrb[0].mxu0
    %v253 = vadd.f32 0.0, %v252
    %v254 = vpop.f32.mrb[0].mxu0
    %255 = vmatprep.mubr.f32.mxu0 0.0
    %256 = vmatmul.mubr.f32.gmra.mrb[0].mxu0 %v136
    %v257 = vpop.f32.mrb[0].mxu0
    %v258 = vadd.f32 0.0, %v257
    %v259 = vpop.f32.mrb[0].mxu0
    %260 = vmatprep.mubr.f32.mxu0 0.0
    %261 = vmatmul.mubr.f32.gmra.mrb[0].mxu0 %v139
    %v262 = vpop.f32.mrb[0].mxu0
    %v263 = vadd.f32 0.0, %v262
    %v264 = vpop.f32.mrb[0].mxu0
    %265 = vmatprep.mubr.f32.mxu0 0.0
    %266 = vmatmul.mubr.f32.gmra.mrb[0].mxu0 %v142
    %v267 = vpop.f32.mrb[0].mxu0
    %v268 = vadd.f32 0.0, %v267
    %v269 = vpop.f32.mrb[0].mxu0
    %270 = vmatprep.mubr.f32.mxu0 0.0
    %271 = vmatmul.mubr.f32.gmra.mrb[0].mxu0 %v145
    %v272 = vpop.f32.mrb[0].mxu0
    %v273 = vadd.f32 0.0, %v272
    %v274 = vpop.f32.mrb[0].mxu0
    %275 = vmatprep.mubr.f32.mxu0 0.0
    %276 = vmatmul.mubr.f32.gmra.mrb[0].mxu0 %v148
    %v277 = vpop.f32.mrb[0].mxu0
    %v278 = vadd.f32 0.0, %v277
    %v279 = vpop.f32.mrb[0].mxu0
    %280 = vmatprep.mubr.f32.mxu0 0.0
    %281 = vmatmul.mubr.f32.gmra.mrb[0].mxu0 %v151
    %v282 = vpop.f32.mrb[0].mxu0
    %v283 = vadd.f32 0.0, %v282
    %v284 = vpop.f32.mrb[0].mxu0
    %285 = vmatprep.mubr.f32.mxu0 0.0
    %286 = vmatmul.mubr.f32.gmra.mrb[0].mxu0 %v154
    %v287 = vpop.f32.mrb[0].mxu0
    %v288 = vadd.f32 0.0, %v287
    %v289 = vpop.f32.mrb[0].mxu0
    %290 = vmatprep.mubr.f32.mxu0 0.0
    %291 = vmatmul.mubr.f32.gmra.mrb[0].mxu0 %v157
    %v292 = vpop.f32.mrb[0].mxu0
    %v293 = vadd.f32 0.0, %v292
    %v294 = vpop.f32.mrb[0].mxu0
    %295 = vmatprep.mubr.f32.mxu0 0.0
    %296 = vmatmul.mubr.f32.gmra.mrb[0].mxu0 %v160
    %v297 = vpop.f32.mrb[0].mxu0
    %v298 = vadd.f32 0.0, %v297
    %v299 = vpop.f32.mrb[0].mxu0
    %300 = vmatprep.mubr.f32.mxu0 0.0
    %301 = vmatmul.mubr.f32.gmra.mrb[0].mxu0 %v163
    %v302 = vpop.f32.mrb[0].mxu0
    %v303 = vadd.f32 0.0, %v302
    %v304 = vpop.f32.mrb[0].mxu0
    %305 = vmatprep.mubr.f32.mxu0 0.0
    %306 = vmatmul.mubr.f32.gmra.mrb[0].mxu0 %v166
    %v307 = vpop.f32.mrb[0].mxu0
    %v308 = vadd.f32 0.0, %v307
    %v309 = vpop.f32.mrb[0].mxu0
    %310 = vmatprep.mubr.f32.mxu0 0.0
    %311 = vmatmul.mubr.f32.gmra.mrb[0].mxu0 %v169
    %v312 = vpop.f32.mrb[0].mxu0
    %v313 = vadd.f32 0.0, %v312
    %v314 = vpop.f32.mrb[0].mxu0
    %315 = vdwg.mxu0
    %v316 = vadd.f32 %v74, %v238
    %v317 = vadd.f32 %v75, %v243
    %v318 = vadd.f32 %v76, %v248
    %v319 = vadd.f32 %v77, %v253
    %v320 = vadd.f32 %v78, %v258
    %v321 = vadd.f32 %v79, %v263
    %v322 = vadd.f32 %v80, %v268
    %v323 = vadd.f32 %v81, %v273
    %v324 = vadd.f32 %v82, %v278
    %v325 = vadd.f32 %v83, %v283
    %v326 = vadd.f32 %v84, %v288
    %v327 = vadd.f32 %v85, %v293
    %v328 = vadd.f32 %v86, %v298
    %v329 = vadd.f32 %v87, %v303
    %v330 = vadd.f32 %v88, %v308
    %v331 = vadd.f32 %v89, %v313
    %332 = vst [vmem:[#allocation2] sm:$0xff] %v316
    %333 = vst [vmem:[#allocation2 + $0x8] sm:$0xff] %v317
    %334 = vst [vmem:[#allocation2 + $0x10] sm:$0xff] %v318
    %335 = vst [vmem:[#allocation2 + $0x18] sm:$0xff] %v319
    %336 = vst [vmem:[#allocation2 + $0x20] sm:$0xff] %v320
    %337 = vst [vmem:[#allocation2 + $0x28] sm:$0xff] %v321
    %338 = vst [vmem:[#allocation2 + $0x30] sm:$0xff] %v322
    %339 = vst [vmem:[#allocation2 + $0x38] sm:$0xff] %v323
    %340 = vst [vmem:[#allocation2 + $0x40] sm:$0xff] %v324
    %341 = vst [vmem:[#allocation2 + $0x48] sm:$0xff] %v325
    %342 = vst [vmem:[#allocation2 + $0x50] sm:$0xff] %v326
    %343 = vst [vmem:[#allocation2 + $0x58] sm:$0xff] %v327
    %344 = vst [vmem:[#allocation2 + $0x60] sm:$0xff] %v328
    %345 = vst [vmem:[#allocation2 + $0x68] sm:$0xff] %v329
    %346 = vst [vmem:[#allocation2 + $0x70] sm:$0xff] %v330
    %347 = vst [vmem:[#allocation2 + $0x78] sm:$0xff] %v331
    // Predicated region
    $region38: #{tpu_custom_call.1} parent=1 // pred_check
      %p348 = pneg %p50
    $region39: #{tpu_custom_call.1} parent=1 // pred_check_branch
      %350 = sbr.rel (%p348) target = $region41
    $region40: #{tpu_custom_call.1} parent=1 // pred_region
      %s351 = sld [smem:[#allocation4]]
      %v352 = vld [vmem:[#allocation2] sm:$0xff]
      %v353 = vld [vmem:[#allocation2 + $0x8] sm:$0xff]
      %v354 = vld [vmem:[#allocation2 + $0x10] sm:$0xff]
      %v355 = vld [vmem:[#allocation2 + $0x18] sm:$0xff]
      %v356 = vld [vmem:[#allocation2 + $0x20] sm:$0xff]
      %v357 = vld [vmem:[#allocation2 + $0x28] sm:$0xff]
      %v358 = vld [vmem:[#allocation2 + $0x30] sm:$0xff]
      %v359 = vld [vmem:[#allocation2 + $0x38] sm:$0xff]
      %v360 = vld [vmem:[#allocation2 + $0x40] sm:$0xff]
      %v361 = vld [vmem:[#allocation2 + $0x48] sm:$0xff]
      %v362 = vld [vmem:[#allocation2 + $0x50] sm:$0xff]
      %v363 = vld [vmem:[#allocation2 + $0x58] sm:$0xff]
      %v364 = vld [vmem:[#allocation2 + $0x60] sm:$0xff]
      %v365 = vld [vmem:[#allocation2 + $0x68] sm:$0xff]
      %v366 = vld [vmem:[#allocation2 + $0x70] sm:$0xff]
      %v367 = vld [vmem:[#allocation2 + $0x78] sm:$0xff]
      %v368 = vmul.f32 %v352, 0.125
      %v369 = vmul.f32 %v353, 0.125
      %v370 = vmul.f32 %v354, 0.125
      %v371 = vmul.f32 %v355, 0.125
      %v372 = vmul.f32 %v356, 0.125
      %v373 = vmul.f32 %v357, 0.125
      %v374 = vmul.f32 %v358, 0.125
      %v375 = vmul.f32 %v359, 0.125
      %v376 = vmul.f32 %v360, 0.125
      %v377 = vmul.f32 %v361, 0.125
      %v378 = vmul.f32 %v362, 0.125
      %v379 = vmul.f32 %v363, 0.125
      %v380 = vmul.f32 %v364, 0.125
      %v381 = vmul.f32 %v365, 0.125
      %v382 = vmul.f32 %v366, 0.125
      %v383 = vmul.f32 %v367, 0.125
      %v384 = vld [vmem:[%s1] sm:$0x1]
      %v385 = vld [vmem:[#allocation5] sm:$0x1]
      %386 = vxpose.xlu0.b32.start [1/16] %v384, 128
      %387 = vxpose.xlu0.b32.cont [2/16] 0.0, 128
      %388 = vxpose.xlu0.b32.cont [3/16] 0.0, 128
      %389 = vxpose.xlu0.b32.cont [4/16] 0.0, 128
      %390 = vxpose.xlu0.b32.cont [5/16] 0.0, 128
      %391 = vxpose.xlu0.b32.cont [6/16] 0.0, 128
      %392 = vxpose.xlu0.b32.cont [7/16] 0.0, 128
      %393 = vxpose.xlu0.b32.cont [8/16] 0.0, 128
      %394 = vxpose.xlu0.b32.cont [9/16] 0.0, 128
      %395 = vxpose.xlu0.b32.cont [10/16] 0.0, 128
      %396 = vxpose.xlu0.b32.cont [11/16] 0.0, 128
      %397 = vxpose.xlu0.b32.cont [12/16] 0.0, 128
      %398 = vxpose.xlu0.b32.cont [13/16] 0.0, 128
      %399 = vxpose.xlu0.b32.cont [14/16] 0.0, 128
      %400 = vxpose.xlu0.b32.cont [15/16] 0.0, 128
      %401 = vxpose.xlu0.b32.end [16/16] 0.0, 128
      %v402 = vpop.trf.xlu0
      %v403 = vpop.trf.xlu0
      %v404 = vpop.trf.xlu0
      %v405 = vpop.trf.xlu0
      %v406 = vpop.trf.xlu0
      %v407 = vpop.trf.xlu0
      %v408 = vpop.trf.xlu0
      %v409 = vpop.trf.xlu0
      %v410 = vpop.trf.xlu0
      %v411 = vpop.trf.xlu0
      %v412 = vpop.trf.xlu0
      %v413 = vpop.trf.xlu0
      %v414 = vpop.trf.xlu0
      %v415 = vpop.trf.xlu0
      %v416 = vpop.trf.xlu0
      %v417 = vpop.trf.xlu0
      %vm418 = vcmask 7168
      %v420 = vsel %vm418, %v402, 0
      %v423 = vsel %vm418, %v403, 0
      %v426 = vsel %vm418, %v404, 0
      %v429 = vsel %vm418, %v405, 0
      %v432 = vsel %vm418, %v406, 0
      %v435 = vsel %vm418, %v407, 0
      %v438 = vsel %vm418, %v408, 0
      %v441 = vsel %vm418, %v409, 0
      %v444 = vsel %vm418, %v410, 0
      %v447 = vsel %vm418, %v411, 0
      %v450 = vsel %vm418, %v412, 0
      %v453 = vsel %vm418, %v413, 0
      %v456 = vsel %vm418, %v414, 0
      %v459 = vsel %vm418, %v415, 0
      %v462 = vsel %vm418, %v416, 0
      %v465 = vsel %vm418, %v417, 0
      %vm467 = vcmask 1040384
      %v469 = vsel %vm467, %v385, 0
      %471 = vmatprep.subr.mxu0 0.0
      %472 = vmatpush1.msra.mxu0 %v469
      %473 = vmatprep.subr.mxu0 0.0
      %474 = vmatpush1.msra.mxu0 0.0
      %475 = vmatprep.subr.mxu0 0.0
      %476 = vmatpush1.msra.mxu0 0.0
      %477 = vmatprep.subr.mxu0 0.0
      %478 = vmatpush1.msra.mxu0 0.0
      %479 = vmatprep.subr.mxu0 0.0
      %480 = vmatpush1.msra.mxu0 0.0
      %481 = vmatprep.subr.mxu0 0.0
      %482 = vmatpush1.msra.mxu0 0.0
      %483 = vmatprep.subr.mxu0 0.0
      %484 = vmatpush1.msra.mxu0 0.0
      %485 = vmatprep.subr.mxu0 0.0
      %486 = vmatpush1.msra.mxu0 0.0
      %487 = vmatprep.subr.mxu0 0.0
      %488 = vmatpush1.msra.mxu0 0.0
      %489 = vmatprep.subr.mxu0 0.0
      %490 = vmatpush1.msra.mxu0 0.0
      %491 = vmatprep.subr.mxu0 0.0
      %492 = vmatpush1.msra.mxu0 0.0
      %493 = vmatprep.subr.mxu0 0.0
      %494 = vmatpush1.msra.mxu0 0.0
      %495 = vmatprep.subr.mxu0 0.0
      %496 = vmatpush1.msra.mxu0 0.0
      %497 = vmatprep.subr.mxu0 0.0
      %498 = vmatpush1.msra.mxu0 0.0
      %499 = vmatprep.subr.mxu0 0.0
      %500 = vmatpush1.msra.mxu0 0.0
      %501 = vmatprep.subr.mxu0 0.0
      %502 = vmatpush1.msra.mxu0 0.0
      %503 = vmatprep.subr.mxu0 0.0
      %504 = vmatpush1.msra.mxu0 0.0
      %505 = vmatprep.subr.mxu0 0.0
      %506 = vmatpush1.msra.mxu0 0.0
      %507 = vmatprep.subr.mxu0 0.0
      %508 = vmatpush1.msra.mxu0 0.0
      %509 = vmatprep.subr.mxu0 0.0
      %510 = vmatpush1.msra.mxu0 0.0
      %511 = vmatprep.subr.mxu0 0.0
      %512 = vmatpush1.msra.mxu0 0.0
      %513 = vmatprep.subr.mxu0 0.0
      %514 = vmatpush1.msra.mxu0 0.0
      %515 = vmatprep.subr.mxu0 0.0
      %516 = vmatpush1.msra.mxu0 0.0
      %517 = vmatprep.subr.mxu0 0.0
      %518 = vmatpush1.msra.mxu0 0.0
      %519 = vmatprep.subr.mxu0 0.0
      %520 = vmatpush1.msra.mxu0 0.0
      %521 = vmatprep.subr.mxu0 0.0
      %522 = vmatpush1.msra.mxu0 0.0
      %523 = vmatprep.subr.mxu0 0.0
      %524 = vmatpush1.msra.mxu0 0.0
      %525 = vmatprep.subr.mxu0 0.0
      %526 = vmatpush1.msra.mxu0 0.0
      %527 = vmatprep.subr.mxu0 0.0
      %528 = vmatpush1.msra.mxu0 0.0
      %529 = vmatprep.subr.mxu0 0.0
      %530 = vmatpush1.msra.mxu0 0.0
      %531 = vmatprep.subr.mxu0 0.0
      %532 = vmatpush1.msra.mxu0 0.0
      %533 = vmatprep.subr.mxu0 0.0
      %534 = vmatpush1.msra.mxu0 0.0
      %535 = vmatprep.mubr.f32.mxu0 0.0
      %536 = vmatmul.mubr.f32.gmra.mrb[0].mxu0 %v420
      %v537 = vpop.f32.mrb[0].mxu0
      %v538 = vadd.f32 0.0, %v537
      %v539 = vpop.f32.mrb[0].mxu0
      %540 = vmatprep.mubr.f32.mxu0 0.0
      %541 = vmatmul.mubr.f32.gmra.mrb[0].mxu0 %v423
      %v542 = vpop.f32.mrb[0].mxu0
      %v543 = vadd.f32 0.0, %v542
      %v544 = vpop.f32.mrb[0].mxu0
      %545 = vmatprep.mubr.f32.mxu0 0.0
      %546 = vmatmul.mubr.f32.gmra.mrb[0].mxu0 %v426
      %v547 = vpop.f32.mrb[0].mxu0
      %v548 = vadd.f32 0.0, %v547
      %v549 = vpop.f32.mrb[0].mxu0
      %550 = vmatprep.mubr.f32.mxu0 0.0
      %551 = vmatmul.mubr.f32.gmra.mrb[0].mxu0 %v429
      %v552 = vpop.f32.mrb[0].mxu0
      %v553 = vadd.f32 0.0, %v552
      %v554 = vpop.f32.mrb[0].mxu0
      %555 = vmatprep.mubr.f32.mxu0 0.0
      %556 = vmatmul.mubr.f32.gmra.mrb[0].mxu0 %v432
      %v557 = vpop.f32.mrb[0].mxu0
      %v558 = vadd.f32 0.0, %v557
      %v559 = vpop.f32.mrb[0].mxu0
      %560 = vmatprep.mubr.f32.mxu0 0.0
      %561 = vmatmul.mubr.f32.gmra.mrb[0].mxu0 %v435
      %v562 = vpop.f32.mrb[0].mxu0
      %v563 = vadd.f32 0.0, %v562
      %v564 = vpop.f32.mrb[0].mxu0
      %565 = vmatprep.mubr.f32.mxu0 0.0
      %566 = vmatmul.mubr.f32.gmra.mrb[0].mxu0 %v438
      %v567 = vpop.f32.mrb[0].mxu0
      %v568 = vadd.f32 0.0, %v567
      %v569 = vpop.f32.mrb[0].mxu0
      %570 = vmatprep.mubr.f32.mxu0 0.0
      %571 = vmatmul.mubr.f32.gmra.mrb[0].mxu0 %v441
      %v572 = vpop.f32.mrb[0].mxu0
      %v573 = vadd.f32 0.0, %v572
      %v574 = vpop.f32.mrb[0].mxu0
      %575 = vmatprep.mubr.f32.mxu0 0.0
      %576 = vmatmul.mubr.f32.gmra.mrb[0].mxu0 %v444
      %v577 = vpop.f32.mrb[0].mxu0
      %v578 = vadd.f32 0.0, %v577
      %v579 = vpop.f32.mrb[0].mxu0
      %580 = vmatprep.mubr.f32.mxu0 0.0
      %581 = vmatmul.mubr.f32.gmra.mrb[0].mxu0 %v447
      %v582 = vpop.f32.mrb[0].mxu0
      %v583 = vadd.f32 0.0, %v582
      %v584 = vpop.f32.mrb[0].mxu0
      %585 = vmatprep.mubr.f32.mxu0 0.0
      %586 = vmatmul.mubr.f32.gmra.mrb[0].mxu0 %v450
      %v587 = vpop.f32.mrb[0].mxu0
      %v588 = vadd.f32 0.0, %v587
      %v589 = vpop.f32.mrb[0].mxu0
      %590 = vmatprep.mubr.f32.mxu0 0.0
      %591 = vmatmul.mubr.f32.gmra.mrb[0].mxu0 %v453
      %v592 = vpop.f32.mrb[0].mxu0
      %v593 = vadd.f32 0.0, %v592
      %v594 = vpop.f32.mrb[0].mxu0
      %595 = vmatprep.mubr.f32.mxu0 0.0
      %596 = vmatmul.mubr.f32.gmra.mrb[0].mxu0 %v456
      %v597 = vpop.f32.mrb[0].mxu0
      %v598 = vadd.f32 0.0, %v597
      %v599 = vpop.f32.mrb[0].mxu0
      %600 = vmatprep.mubr.f32.mxu0 0.0
      %601 = vmatmul.mubr.f32.gmra.mrb[0].mxu0 %v459
      %v602 = vpop.f32.mrb[0].mxu0
      %v603 = vadd.f32 0.0, %v602
      %v604 = vpop.f32.mrb[0].mxu0
      %605 = vmatprep.mubr.f32.mxu0 0.0
      %606 = vmatmul.mubr.f32.gmra.mrb[0].mxu0 %v462
      %v607 = vpop.f32.mrb[0].mxu0
      %v608 = vadd.f32 0.0, %v607
      %v609 = vpop.f32.mrb[0].mxu0
      %610 = vmatprep.mubr.f32.mxu0 0.0
      %611 = vmatmul.mubr.f32.gmra.mrb[0].mxu0 %v465
      %v612 = vpop.f32.mrb[0].mxu0
      %v613 = vadd.f32 0.0, %v612
      %v614 = vpop.f32.mrb[0].mxu0
      %615 = vdwg.mxu0
      %v616 = vsub.f32 %v368, %v538
      %v617 = vsub.f32 %v369, %v543
      %v618 = vsub.f32 %v370, %v548
      %v619 = vsub.f32 %v371, %v553
      %v620 = vsub.f32 %v372, %v558
      %v621 = vsub.f32 %v373, %v563
      %v622 = vsub.f32 %v374, %v568
      %v623 = vsub.f32 %v375, %v573
      %v624 = vsub.f32 %v376, %v578
      %v625 = vsub.f32 %v377, %v583
      %v626 = vsub.f32 %v378, %v588
      %v627 = vsub.f32 %v379, %v593
      %v628 = vsub.f32 %v380, %v598
      %v629 = vsub.f32 %v381, %v603
      %v630 = vsub.f32 %v382, %v608
      %v631 = vsub.f32 %v383, %v613
      %v632 = vld [vmem:[%s2] sm:$0x1]
      %v633 = vld [vmem:[#allocation8] sm:$0x1]
      %634 = vxpose.xlu0.b32.start [1/16] %v632, 128
      %635 = vxpose.xlu0.b32.cont [2/16] 0.0, 128
      %636 = vxpose.xlu0.b32.cont [3/16] 0.0, 128
      %637 = vxpose.xlu0.b32.cont [4/16] 0.0, 128
      %638 = vxpose.xlu0.b32.cont [5/16] 0.0, 128
      %639 = vxpose.xlu0.b32.cont [6/16] 0.0, 128
      %640 = vxpose.xlu0.b32.cont [7/16] 0.0, 128
      %641 = vxpose.xlu0.b32.cont [8/16] 0.0, 128
      %642 = vxpose.xlu0.b32.cont [9/16] 0.0, 128
      %643 = vxpose.xlu0.b32.cont [10/16] 0.0, 128
      %644 = vxpose.xlu0.b32.cont [11/16] 0.0, 128
      %645 = vxpose.xlu0.b32.cont [12/16] 0.0, 128
      %646 = vxpose.xlu0.b32.cont [13/16] 0.0, 128
      %647 = vxpose.xlu0.b32.cont [14/16] 0.0, 128
      %648 = vxpose.xlu0.b32.cont [15/16] 0.0, 128
      %649 = vxpose.xlu0.b32.end [16/16] 0.0, 128
      %v650 = vpop.trf.xlu0
      %v651 = vpop.trf.xlu0
      %v652 = vpop.trf.xlu0
      %v653 = vpop.trf.xlu0
      %v654 = vpop.trf.xlu0
      %v655 = vpop.trf.xlu0
      %v656 = vpop.trf.xlu0
      %v657 = vpop.trf.xlu0
      %v658 = vpop.trf.xlu0
      %v659 = vpop.trf.xlu0
      %v660 = vpop.trf.xlu0
      %v661 = vpop.trf.xlu0
      %v662 = vpop.trf.xlu0
      %v663 = vpop.trf.xlu0
      %v664 = vpop.trf.xlu0
      %v665 = vpop.trf.xlu0
      %v667 = vsel %vm418, %v650, 0
      %v670 = vsel %vm418, %v651, 0
      %v673 = vsel %vm418, %v652, 0
      %v676 = vsel %vm418, %v653, 0
      %v679 = vsel %vm418, %v654, 0
      %v682 = vsel %vm418, %v655, 0
      %v685 = vsel %vm418, %v656, 0
      %v688 = vsel %vm418, %v657, 0
      %v691 = vsel %vm418, %v658, 0
      %v694 = vsel %vm418, %v659, 0
      %v697 = vsel %vm418, %v660, 0
      %v700 = vsel %vm418, %v661, 0
      %v703 = vsel %vm418, %v662, 0
      %v706 = vsel %vm418, %v663, 0
      %v709 = vsel %vm418, %v664, 0
      %v712 = vsel %vm418, %v665, 0
      %v715 = vsel %vm467, %v633, 0
      %717 = vmatprep.subr.mxu0 0.0
      %718 = vmatpush1.msra.mxu0 %v715
      %719 = vmatprep.subr.mxu0 0.0
      %720 = vmatpush1.msra.mxu0 0.0
      %721 = vmatprep.subr.mxu0 0.0
      %722 = vmatpush1.msra.mxu0 0.0
      %723 = vmatprep.subr.mxu0 0.0
      %724 = vmatpush1.msra.mxu0 0.0
      %725 = vmatprep.subr.mxu0 0.0
      %726 = vmatpush1.msra.mxu0 0.0
      %727 = vmatprep.subr.mxu0 0.0
      %728 = vmatpush1.msra.mxu0 0.0
      %729 = vmatprep.subr.mxu0 0.0
      %730 = vmatpush1.msra.mxu0 0.0
      %731 = vmatprep.subr.mxu0 0.0
      %732 = vmatpush1.msra.mxu0 0.0
      %733 = vmatprep.subr.mxu0 0.0
      %734 = vmatpush1.msra.mxu0 0.0
      %735 = vmatprep.subr.mxu0 0.0
      %736 = vmatpush1.msra.mxu0 0.0
      %737 = vmatprep.subr.mxu0 0.0
      %738 = vmatpush1.msra.mxu0 0.0
      %739 = vmatprep.subr.mxu0 0.0
      %740 = vmatpush1.msra.mxu0 0.0
      %741 = vmatprep.subr.mxu0 0.0
      %742 = vmatpush1.msra.mxu0 0.0
      %743 = vmatprep.subr.mxu0 0.0
      %744 = vmatpush1.msra.mxu0 0.0
      %745 = vmatprep.subr.mxu0 0.0
      %746 = vmatpush1.msra.mxu0 0.0
      %747 = vmatprep.subr.mxu0 0.0
      %748 = vmatpush1.msra.mxu0 0.0
      %749 = vmatprep.subr.mxu0 0.0
      %750 = vmatpush1.msra.mxu0 0.0
      %751 = vmatprep.subr.mxu0 0.0
      %752 = vmatpush1.msra.mxu0 0.0
      %753 = vmatprep.subr.mxu0 0.0
      %754 = vmatpush1.msra.mxu0 0.0
      %755 = vmatprep.subr.mxu0 0.0
      %756 = vmatpush1.msra.mxu0 0.0
      %757 = vmatprep.subr.mxu0 0.0
      %758 = vmatpush1.msra.mxu0 0.0
      %759 = vmatprep.subr.mxu0 0.0
      %760 = vmatpush1.msra.mxu0 0.0
      %761 = vmatprep.subr.mxu0 0.0
      %762 = vmatpush1.msra.mxu0 0.0
      %763 = vmatprep.subr.mxu0 0.0
      %764 = vmatpush1.msra.mxu0 0.0
      %765 = vmatprep.subr.mxu0 0.0
      %766 = vmatpush1.msra.mxu0 0.0
      %767 = vmatprep.subr.mxu0 0.0
      %768 = vmatpush1.msra.mxu0 0.0
      %769 = vmatprep.subr.mxu0 0.0
      %770 = vmatpush1.msra.mxu0 0.0
      %771 = vmatprep.subr.mxu0 0.0
      %772 = vmatpush1.msra.mxu0 0.0
      %773 = vmatprep.subr.mxu0 0.0
      %774 = vmatpush1.msra.mxu0 0.0
      %775 = vmatprep.subr.mxu0 0.0
      %776 = vmatpush1.msra.mxu0 0.0
      %777 = vmatprep.subr.mxu0 0.0
      %778 = vmatpush1.msra.mxu0 0.0
      %779 = vmatprep.subr.mxu0 0.0
      %780 = vmatpush1.msra.mxu0 0.0
      %781 = vmatprep.mubr.f32.mxu0 0.0
      %782 = vmatmul.mubr.f32.gmra.mrb[0].mxu0 %v667
      %v783 = vpop.f32.mrb[0].mxu0
      %v784 = vadd.f32 0.0, %v783
      %v785 = vpop.f32.mrb[0].mxu0
      %786 = vmatprep.mubr.f32.mxu0 0.0
      %787 = vmatmul.mubr.f32.gmra.mrb[0].mxu0 %v670
      %v788 = vpop.f32.mrb[0].mxu0
      %v789 = vadd.f32 0.0, %v788
      %v790 = vpop.f32.mrb[0].mxu0
      %791 = vmatprep.mubr.f32.mxu0 0.0
      %792 = vmatmul.mubr.f32.gmra.mrb[0].mxu0 %v673
      %v793 = vpop.f32.mrb[0].mxu0
      %v794 = vadd.f32 0.0, %v793
      %v795 = vpop.f32.mrb[0].mxu0
      %796 = vmatprep.mubr.f32.mxu0 0.0
      %797 = vmatmul.mubr.f32.gmra.mrb[0].mxu0 %v676
      %v798 = vpop.f32.mrb[0].mxu0
      %v799 = vadd.f32 0.0, %v798
      %v800 = vpop.f32.mrb[0].mxu0
      %801 = vmatprep.mubr.f32.mxu0 0.0
      %802 = vmatmul.mubr.f32.gmra.mrb[0].mxu0 %v679
      %v803 = vpop.f32.mrb[0].mxu0
      %v804 = vadd.f32 0.0, %v803
      %v805 = vpop.f32.mrb[0].mxu0
      %806 = vmatprep.mubr.f32.mxu0 0.0
      %807 = vmatmul.mubr.f32.gmra.mrb[0].mxu0 %v682
      %v808 = vpop.f32.mrb[0].mxu0
      %v809 = vadd.f32 0.0, %v808
      %v810 = vpop.f32.mrb[0].mxu0
      %811 = vmatprep.mubr.f32.mxu0 0.0
      %812 = vmatmul.mubr.f32.gmra.mrb[0].mxu0 %v685
      %v813 = vpop.f32.mrb[0].mxu0
      %v814 = vadd.f32 0.0, %v813
      %v815 = vpop.f32.mrb[0].mxu0
      %816 = vmatprep.mubr.f32.mxu0 0.0
      %817 = vmatmul.mubr.f32.gmra.mrb[0].mxu0 %v688
      %v818 = vpop.f32.mrb[0].mxu0
      %v819 = vadd.f32 0.0, %v818
      %v820 = vpop.f32.mrb[0].mxu0
      %821 = vmatprep.mubr.f32.mxu0 0.0
      %822 = vmatmul.mubr.f32.gmra.mrb[0].mxu0 %v691
      %v823 = vpop.f32.mrb[0].mxu0
      %v824 = vadd.f32 0.0, %v823
      %v825 = vpop.f32.mrb[0].mxu0
      %826 = vmatprep.mubr.f32.mxu0 0.0
      %827 = vmatmul.mubr.f32.gmra.mrb[0].mxu0 %v694
      %v828 = vpop.f32.mrb[0].mxu0
      %v829 = vadd.f32 0.0, %v828
      %v830 = vpop.f32.mrb[0].mxu0
      %831 = vmatprep.mubr.f32.mxu0 0.0
      %832 = vmatmul.mubr.f32.gmra.mrb[0].mxu0 %v697
      %v833 = vpop.f32.mrb[0].mxu0
      %v834 = vadd.f32 0.0, %v833
      %v835 = vpop.f32.mrb[0].mxu0
      %836 = vmatprep.mubr.f32.mxu0 0.0
      %837 = vmatmul.mubr.f32.gmra.mrb[0].mxu0 %v700
      %v838 = vpop.f32.mrb[0].mxu0
      %v839 = vadd.f32 0.0, %v838
      %v840 = vpop.f32.mrb[0].mxu0
      %841 = vmatprep.mubr.f32.mxu0 0.0
      %842 = vmatmul.mubr.f32.gmra.mrb[0].mxu0 %v703
      %v843 = vpop.f32.mrb[0].mxu0
      %v844 = vadd.f32 0.0, %v843
      %v845 = vpop.f32.mrb[0].mxu0
      %846 = vmatprep.mubr.f32.mxu0 0.0
      %847 = vmatmul.mubr.f32.gmra.mrb[0].mxu0 %v706
      %v848 = vpop.f32.mrb[0].mxu0
      %v849 = vadd.f32 0.0, %v848
      %v850 = vpop.f32.mrb[0].mxu0
      %851 = vmatprep.mubr.f32.mxu0 0.0
      %852 = vmatmul.mubr.f32.gmra.mrb[0].mxu0 %v709
      %v853 = vpop.f32.mrb[0].mxu0
      %v854 = vadd.f32 0.0, %v853
      %v855 = vpop.f32.mrb[0].mxu0
      %856 = vmatprep.mubr.f32.mxu0 0.0
      %857 = vmatmul.mubr.f32.gmra.mrb[0].mxu0 %v712
      %v858 = vpop.f32.mrb[0].mxu0
      %v859 = vadd.f32 0.0, %v858
      %v860 = vpop.f32.mrb[0].mxu0
      %861 = vdwg.mxu0
      %v862 = vmul.f32 %v616, %v784
      %v863 = vmul.f32 %v617, %v789
      %v864 = vmul.f32 %v618, %v794
      %v865 = vmul.f32 %v619, %v799
      %v866 = vmul.f32 %v620, %v804
      %v867 = vmul.f32 %v621, %v809
      %v868 = vmul.f32 %v622, %v814
      %v869 = vmul.f32 %v623, %v819
      %v870 = vmul.f32 %v624, %v824
      %v871 = vmul.f32 %v625, %v829
      %v872 = vmul.f32 %v626, %v834
      %v873 = vmul.f32 %v627, %v839
      %v874 = vmul.f32 %v628, %v844
      %v875 = vmul.f32 %v629, %v849
      %v876 = vmul.f32 %v630, %v854
      %v877 = vmul.f32 %v631, %v859
      %v878 = vmul.f32 %v862, %v862
      %v879 = vmul.f32 %v863, %v863
      %v880 = vmul.f32 %v864, %v864
      %v881 = vmul.f32 %v865, %v865
      %v882 = vmul.f32 %v866, %v866
      %v883 = vmul.f32 %v867, %v867
      %v884 = vmul.f32 %v868, %v868
      %v885 = vmul.f32 %v869, %v869
      %v886 = vmul.f32 %v870, %v870
      %v887 = vmul.f32 %v871, %v871
      %v888 = vmul.f32 %v872, %v872
      %v889 = vmul.f32 %v873, %v873
      %v890 = vmul.f32 %v874, %v874
      %v891 = vmul.f32 %v875, %v875
      %v892 = vmul.f32 %v876, %v876
      %v893 = vmul.f32 %v877, %v877
      %v894 = vadd.f32 %v878, %v879
      %v895 = vadd.f32 %v894, %v880
      %v896 = vadd.f32 %v895, %v881
      %v897 = vadd.f32 %v896, %v882
      %v898 = vadd.f32 %v897, %v883
      %v899 = vadd.f32 %v898, %v884
      %v900 = vadd.f32 %v899, %v885
      %v901 = vadd.f32 %v900, %v886
      %v902 = vadd.f32 %v901, %v887
      %v903 = vadd.f32 %v902, %v888
      %v904 = vadd.f32 %v903, %v889
      %v905 = vadd.f32 %v904, %v890
      %v906 = vadd.f32 %v905, %v891
      %v907 = vadd.f32 %v906, %v892
      %v908 = vadd.f32 %v907, %v893
      %909 = vadd.xlane.f32.xlu0 %v908
      %v910 = vpop.xlane.xlu0 %909
      %v911 = vrot.slane %v910, 4
      %v912 = vadd.f32 %v910, %v911
      %v913 = vrot.slane %v912, 2
      %v914 = vadd.f32 %v912, %v913
      %v915 = vrot.slane %v914, 1
      %v916 = vadd.f32 %v914, %v915
      %s917 = vtos %v916
      %s918 = smul.f32 %s351, %s917
      %v919 = vstv %s918
      %920 = vst [vmem:[#allocation10] sm:$0xff] %v919
      %p921 = scmp.eq.s32.totalorder 0, 0
      // Predicated region
      $region42: #{tpu_custom_call.1} parent=40 // pred_check
        %p922 = pneg %p921
      $region43: #{tpu_custom_call.1} parent=40 // pred_check_branch
        %924 = sbr.rel (%p922) target = $region45
      $region44: #{tpu_custom_call.1} parent=40 // pred_region
        %v925 = vlaneseq
        %v926 = vshrl.u32 %v925, 7
        %v927 = vadd.s32 %v926, 8
        %v928 = vadd.s32 %v926, 16
        %v929 = vadd.s32 %v926, 24
        %v930 = vadd.s32 %v926, 32
        %v931 = vadd.s32 %v926, 40
        %v932 = vadd.s32 %v926, 48
        %v933 = vadd.s32 %v926, 56
        %v934 = vadd.s32 %v926, 64
        %v935 = vadd.s32 %v926, 72
        %v936 = vadd.s32 %v926, 80
        %v937 = vadd.s32 %v926, 88
        %v938 = vadd.s32 %v926, 96
        %v939 = vadd.s32 %v926, 104
        %v940 = vadd.s32 %v926, 112
        %v941 = vadd.s32 %v926, 120
        %v942 = vlaneseq
        %v943 = vand.u32 %v942, 127
        %vm944 = vcmp.eq.s32.totalorder %v926, %v943
        %vm945 = vcmp.eq.s32.totalorder %v927, %v943
        %vm946 = vcmp.eq.s32.totalorder %v928, %v943
        %vm947 = vcmp.eq.s32.totalorder %v929, %v943
        %vm948 = vcmp.eq.s32.totalorder %v930, %v943
        %vm949 = vcmp.eq.s32.totalorder %v931, %v943
        %vm950 = vcmp.eq.s32.totalorder %v932, %v943
        %vm951 = vcmp.eq.s32.totalorder %v933, %v943
        %vm952 = vcmp.eq.s32.totalorder %v934, %v943
        %vm953 = vcmp.eq.s32.totalorder %v935, %v943
        %vm954 = vcmp.eq.s32.totalorder %v936, %v943
        %vm955 = vcmp.eq.s32.totalorder %v937, %v943
        %vm956 = vcmp.eq.s32.totalorder %v938, %v943
        %vm957 = vcmp.eq.s32.totalorder %v939, %v943
        %vm958 = vcmp.eq.s32.totalorder %v940, %v943
        %vm959 = vcmp.eq.s32.totalorder %v941, %v943
        %s960 = smul.u32 0, 128
        %v961 = vstv %s960
        %v962 = vadd.s32 %v961, %v926
        %v963 = vadd.s32 %v961, %v927
        %v964 = vadd.s32 %v961, %v928
        %v965 = vadd.s32 %v961, %v929
        %v966 = vadd.s32 %v961, %v930
        %v967 = vadd.s32 %v961, %v931
        %v968 = vadd.s32 %v961, %v932
        %v969 = vadd.s32 %v961, %v933
        %v970 = vadd.s32 %v961, %v934
        %v971 = vadd.s32 %v961, %v935
        %v972 = vadd.s32 %v961, %v936
        %v973 = vadd.s32 %v961, %v937
        %v974 = vadd.s32 %v961, %v938
        %v975 = vadd.s32 %v961, %v939
        %v976 = vadd.s32 %v961, %v940
        %v977 = vadd.s32 %v961, %v941
        %vm978 = vcmp.lt.s32.totalorder %v962, 32
        %vm979 = vcmp.lt.s32.totalorder %v963, 32
        %vm980 = vcmp.lt.s32.totalorder %v964, 32
        %vm981 = vcmp.lt.s32.totalorder %v965, 32
        %vm982 = vcmp.lt.s32.totalorder %v966, 32
        %vm983 = vcmp.lt.s32.totalorder %v967, 32
        %vm984 = vcmp.lt.s32.totalorder %v968, 32
        %vm985 = vcmp.lt.s32.totalorder %v969, 32
        %vm986 = vcmp.lt.s32.totalorder %v970, 32
        %vm987 = vcmp.lt.s32.totalorder %v971, 32
        %vm988 = vcmp.lt.s32.totalorder %v972, 32
        %vm989 = vcmp.lt.s32.totalorder %v973, 32
        %vm990 = vcmp.lt.s32.totalorder %v974, 32
        %vm991 = vcmp.lt.s32.totalorder %v975, 32
        %vm992 = vcmp.lt.s32.totalorder %v976, 32
        %vm993 = vcmp.lt.s32.totalorder %v977, 32
        %vm994 = vmand %vm944, %vm978
        %vm995 = vmand %vm945, %vm979
        %vm996 = vmand %vm946, %vm980
        %vm997 = vmand %vm947, %vm981
        %vm998 = vmand %vm948, %vm982
        %vm999 = vmand %vm949, %vm983
        %vm1000 = vmand %vm950, %vm984
        %vm1001 = vmand %vm951, %vm985
        %vm1002 = vmand %vm952, %vm986
        %vm1003 = vmand %vm953, %vm987
        %vm1004 = vmand %vm954, %vm988
        %vm1005 = vmand %vm955, %vm989
        %vm1006 = vmand %vm956, %vm990
        %vm1007 = vmand %vm957, %vm991
        %vm1008 = vmand %vm958, %vm992
        %vm1009 = vmand %vm959, %vm993
        %v1010 = vsub.f32 1.0, %v862
        %v1011 = vsub.f32 1.0, %v863
        %v1012 = vsub.f32 1.0, %v864
        %v1013 = vsub.f32 1.0, %v865
        %v1014 = vsub.f32 1.0, %v866
        %v1015 = vsub.f32 1.0, %v867
        %v1016 = vsub.f32 1.0, %v868
        %v1017 = vsub.f32 1.0, %v869
        %v1018 = vsub.f32 1.0, %v870
        %v1019 = vsub.f32 1.0, %v871
        %v1020 = vsub.f32 1.0, %v872
        %v1021 = vsub.f32 1.0, %v873
        %v1022 = vsub.f32 1.0, %v874
        %v1023 = vsub.f32 1.0, %v875
        %v1024 = vsub.f32 1.0, %v876
        %v1025 = vsub.f32 1.0, %v877
        %v1026 = vmul.f32 %v1010, %v1010
        %v1027 = vmul.f32 %v1011, %v1011
        %v1028 = vmul.f32 %v1012, %v1012
        %v1029 = vmul.f32 %v1013, %v1013
        %v1030 = vmul.f32 %v1014, %v1014
        %v1031 = vmul.f32 %v1015, %v1015
        %v1032 = vmul.f32 %v1016, %v1016
        %v1033 = vmul.f32 %v1017, %v1017
        %v1034 = vmul.f32 %v1018, %v1018
        %v1035 = vmul.f32 %v1019, %v1019
        %v1036 = vmul.f32 %v1020, %v1020
        %v1037 = vmul.f32 %v1021, %v1021
        %v1038 = vmul.f32 %v1022, %v1022
        %v1039 = vmul.f32 %v1023, %v1023
        %v1040 = vmul.f32 %v1024, %v1024
        %v1041 = vmul.f32 %v1025, %v1025
        %v1042 = vstv %s351
        %v1043 = vmul.f32 %v1042, %v878
        %v1044 = vmul.f32 %v1042, %v879
        %v1045 = vmul.f32 %v1042, %v880
        %v1046 = vmul.f32 %v1042, %v881
        %v1047 = vmul.f32 %v1042, %v882
        %v1048 = vmul.f32 %v1042, %v883
        %v1049 = vmul.f32 %v1042, %v884
        %v1050 = vmul.f32 %v1042, %v885
        %v1051 = vmul.f32 %v1042, %v886
        %v1052 = vmul.f32 %v1042, %v887
        %v1053 = vmul.f32 %v1042, %v888
        %v1054 = vmul.f32 %v1042, %v889
        %v1055 = vmul.f32 %v1042, %v890
        %v1056 = vmul.f32 %v1042, %v891
        %v1057 = vmul.f32 %v1042, %v892
        %v1058 = vmul.f32 %v1042, %v893
        %v1059 = vsub.f32 %v1026, %v1043
        %v1060 = vsub.f32 %v1027, %v1044
        %v1061 = vsub.f32 %v1028, %v1045
        %v1062 = vsub.f32 %v1029, %v1046
        %v1063 = vsub.f32 %v1030, %v1047
        %v1064 = vsub.f32 %v1031, %v1048
        %v1065 = vsub.f32 %v1032, %v1049
        %v1066 = vsub.f32 %v1033, %v1050
        %v1067 = vsub.f32 %v1034, %v1051
        %v1068 = vsub.f32 %v1035, %v1052
        %v1069 = vsub.f32 %v1036, %v1053
        %v1070 = vsub.f32 %v1037, %v1054
        %v1071 = vsub.f32 %v1038, %v1055
        %v1072 = vsub.f32 %v1039, %v1056
        %v1073 = vsub.f32 %v1040, %v1057
        %v1074 = vsub.f32 %v1041, %v1058
        %v1075 = vsel %vm994, %v1059, 0.0
        %v1076 = vsel %vm995, %v1060, 0.0
        %v1077 = vsel %vm996, %v1061, 0.0
        %v1078 = vsel %vm997, %v1062, 0.0
        %v1079 = vsel %vm998, %v1063, 0.0
        %v1080 = vsel %vm999, %v1064, 0.0
        %v1081 = vsel %vm1000, %v1065, 0.0
        %v1082 = vsel %vm1001, %v1066, 0.0
        %v1083 = vsel %vm1002, %v1067, 0.0
        %v1084 = vsel %vm1003, %v1068, 0.0
        %v1085 = vsel %vm1004, %v1069, 0.0
        %v1086 = vsel %vm1005, %v1070, 0.0
        %v1087 = vsel %vm1006, %v1071, 0.0
        %v1088 = vsel %vm1007, %v1072, 0.0
        %v1089 = vsel %vm1008, %v1073, 0.0
        %v1090 = vsel %vm1009, %v1074, 0.0
        %v1091 = vadd.f32 %v1075, %v1076
        %v1092 = vadd.f32 %v1091, %v1077
        %v1093 = vadd.f32 %v1092, %v1078
        %v1094 = vadd.f32 %v1093, %v1079
        %v1095 = vadd.f32 %v1094, %v1080
        %v1096 = vadd.f32 %v1095, %v1081
        %v1097 = vadd.f32 %v1096, %v1082
        %v1098 = vadd.f32 %v1097, %v1083
        %v1099 = vadd.f32 %v1098, %v1084
        %v1100 = vadd.f32 %v1099, %v1085
        %v1101 = vadd.f32 %v1100, %v1086
        %v1102 = vadd.f32 %v1101, %v1087
        %v1103 = vadd.f32 %v1102, %v1088
        %v1104 = vadd.f32 %v1103, %v1089
        %v1105 = vadd.f32 %v1104, %v1090
        %1106 = vadd.xlane.f32.xlu0 %v1105
        %v1107 = vpop.xlane.xlu0 %1106
        %v1108 = vrot.slane %v1107, 4
        %v1109 = vadd.f32 %v1107, %v1108
        %v1110 = vrot.slane %v1109, 2
        %v1111 = vadd.f32 %v1109, %v1110
        %v1112 = vrot.slane %v1111, 1
        %v1113 = vadd.f32 %v1111, %v1112
        %s1114 = vtos %v1113
        %s1115 = sadd.f32 %s918, %s1114
        %v1116 = vstv %s1115
        %1117 = vst [vmem:[#allocation10] sm:$0xff] %v1116
      $region45: #{tpu_custom_call.1} parent=40 // pred_fallthru
        _
    $region41: #{tpu_custom_call.1} parent=1 // pred_fallthru
      _
    // Predicated region
    $region46: #{tpu_custom_call.1} parent=1 // pred_check
      _
    $region47: #{tpu_custom_call.1} parent=1 // pred_check_branch
      %1119 = sbr.rel (0) target = $region49
    $region48: #{tpu_custom_call.1} parent=1 // pred_region
      %s1121 = ssub.s32 128, 128
      %1122 = vsyncadd [#allocation7], %s1121
      %s1124 = sshll.u32 [#allocation10], 4
      %s1125 = int_to_ptr.vmem [resolvable:$true] %s1124
      %1127 = dma.vmem_to_hbm [thread:$0]  %s1125, 128, %s7, [#allocation7]
    $region49: #{tpu_custom_call.1} parent=1 // pred_fallthru
      _
    // Predicated region
    $region50: #{tpu_custom_call.1} parent=1 // pred_check
      _
    $region51: #{tpu_custom_call.1} parent=1 // pred_check_branch
      %1129 = sbr.rel (0) target = $region53
    $region52: #{tpu_custom_call.1} parent=1 // pred_region
      %1130 = dma.done [#allocation7], 128
    $region53: #{tpu_custom_call.1} parent=1 // pred_fallthru
      _
    %1131 = vsyncpa [#allocation6], 1
    %1132 = vsyncpa [#allocation9], 1
    %1133 = vsyncpa [#allocation7], 1

</llo_original>
